<compile_context>
chip_gen: v6e
topology: v6e:2x2x1
jax: 0.10.0
libtpu: 0.0.40
codegen_flags: <defaults>
</compile_context>

<pallas_src>
import jax
import jax.numpy as jnp
from jax.experimental import pallas as pl
from jax.experimental.pallas import tpu as pltpu

IN_F = 2          # logical input features
HID = 4           # logical hidden features
OUT_F = 2         # logical output features
F_PAD = 128       # lane padding for hidden activations / resident weights (free: VMEM only)
B_MIN = 8         # sublane multiple for the batch axis
B_TILE_MAX = 2048 # large batch tile to amortize per-grid-step overhead


def mlp_kernel(x_ref, w1_ref, w2_ref, w3_ref, b_ref, o_ref):
    """Whole forward pass for one batch tile: 3 MXU matmuls + bias + ReLU.

    x_ref: (b_tile, 2)   w1: (2, 128)   w2: (128, 128)   w3: (128, 2)
    b_ref: (8, 128) packed biases (row 0 = b1, row 1 = b2, row 2[:2] = b3)
    o_ref: (b_tile, 2)   -- logical-width output, no lane-padded writeback
    """
    x = x_ref[...]
    h1 = jnp.dot(x, w1_ref[...], preferred_element_type=jnp.float32) + b_ref[0:1, :]
    h1 = jnp.maximum(h1, 0.0)
    h2 = jnp.dot(h1, w2_ref[...], preferred_element_type=jnp.float32) + b_ref[1:2, :]
    h2 = jnp.maximum(h2, 0.0)
    o_ref[...] = (
        jnp.dot(h2, w3_ref[...], preferred_element_type=jnp.float32) + b_ref[2:3, 0:OUT_F]
    )


def init_params(key):
    """Deterministic parameter init matching nn.Linear shapes (stored as (in, out))."""
    k1, k2, k3, k4, k5, k6 = jax.random.split(key, 6)
    return {
        "w1": jax.random.normal(k1, (IN_F, HID), jnp.float32) * 0.5,
        "b1": jax.random.normal(k2, (HID,), jnp.float32) * 0.1,
        "w2": jax.random.normal(k3, (HID, HID), jnp.float32) * 0.5,
        "b2": jax.random.normal(k4, (HID,), jnp.float32) * 0.1,
        "w3": jax.random.normal(k5, (HID, OUT_F), jnp.float32) * 0.5,
        "b3": jax.random.normal(k6, (OUT_F,), jnp.float32) * 0.1,
    }


def prepare_padded_params(p):
    """Pad + pack parameters ONCE.  Call outside the hot path and reuse the result."""
    w1 = jnp.zeros((IN_F, F_PAD), jnp.float32).at[:, :HID].set(p["w1"])
    w2 = jnp.zeros((F_PAD, F_PAD), jnp.float32).at[:HID, :HID].set(p["w2"])
    w3 = jnp.zeros((F_PAD, OUT_F), jnp.float32).at[:HID, :].set(p["w3"])
    b = jnp.zeros((8, F_PAD), jnp.float32)
    b = b.at[0, :HID].set(p["b1"])
    b = b.at[1, :HID].set(p["b2"])
    b = b.at[2, :OUT_F].set(p["b3"])
    return {"w1": w1, "w2": w2, "w3": w3, "b": b}


def _round_up(n, m):
    return ((n + m - 1) // m) * m


@jax.jit
def mlp_forward(x, padded):
    """x: (batch, 2) float32.  padded: output of prepare_padded_params."""
    x = x.astype(jnp.float32)
    batch = x.shape[0]
    b_pad = _round_up(batch, B_MIN)

    # Tile choice: as large as possible (amortize per-step cost) but >= 2 grid steps
    # whenever the batch allows it, so v7x's two TensorCores both get work.
    if b_pad > B_MIN:
        b_tile = min(B_TILE_MAX, _round_up((b_pad + 1) // 2, B_MIN))
    else:
        b_tile = B_MIN
    b_pad = _round_up(b_pad, b_tile)
    grid = (b_pad // b_tile,)

    # Only pad the batch axis, and only if needed (x stays 2 features wide = 8 B/row).
    x_in = x if b_pad == batch else jnp.zeros((b_pad, IN_F), jnp.float32).at[:batch].set(x)

    out = pl.pallas_call(
        mlp_kernel,
        out_shape=jax.ShapeDtypeStruct((b_pad, OUT_F), jnp.float32),
        grid=grid,
        in_specs=[
            pl.BlockSpec((b_tile, IN_F), lambda i: (i, 0)),    # x tile (pipelined, 8 B/row)
            pl.BlockSpec((IN_F, F_PAD), lambda i: (0, 0)),     # w1  (VMEM-resident)
            pl.BlockSpec((F_PAD, F_PAD), lambda i: (0, 0)),    # w2  (VMEM-resident)
            pl.BlockSpec((F_PAD, OUT_F), lambda i: (0, 0)),    # w3  (VMEM-resident)
            pl.BlockSpec((8, F_PAD), lambda i: (0, 0)),        # packed biases (resident)
        ],
        out_specs=pl.BlockSpec((b_tile, OUT_F), lambda i: (i, 0)),  # logical-width writeback
        compiler_params=pltpu.CompilerParams(
            dimension_semantics=("parallel",)),                # batch axis over both TCs (v7x)
    )(x_in, padded["w1"], padded["w2"], padded["w3"], padded["b"])

    return out if b_pad == batch else out[:batch]


def mlp_ref(x, p):
    h1 = jnp.maximum(x @ p["w1"] + p["b1"], 0.0)
    h2 = jnp.maximum(h1 @ p["w2"] + p["b2"], 0.0)
    return h2 @ p["w3"] + p["b3"]


if __name__ == "__main__":
    key = jax.random.PRNGKey(0)
    kx, kp = jax.random.split(key)
    x = jax.random.normal(kx, (8, 2), jnp.float32)   # Iris-style 2-feature input, batch=8
    params = init_params(kp)

    padded = prepare_padded_params(params)           # hoisted: done once, reused per call
    padded = jax.tree_util.tree_map(jax.device_put, padded)

    out = jax.block_until_ready(mlp_forward(x, padded))
    ref = mlp_ref(x, params)

    assert out.shape == (8, 2), out.shape
    assert jnp.allclose(out, ref, atol=1e-5, rtol=1e-5), (out, ref)
    print("KERNEL_OK")
</pallas_src>

<mosaic_0001>
module attributes {stable_mosaic.version = 11 : i64} {
  func.func @mlp_kernel(%arg0: i32, %arg1: memref<8x2xf32, #tpu.memory_space<vmem>>, %arg2: memref<2x128xf32, #tpu.memory_space<vmem>>, %arg3: memref<128x128xf32, #tpu.memory_space<vmem>>, %arg4: memref<128x2xf32, #tpu.memory_space<vmem>>, %arg5: memref<8x128xf32, #tpu.memory_space<vmem>>, %arg6: memref<8x2xf32, #tpu.memory_space<vmem>>) attributes {dimension_semantics = [#tpu.dimension_semantics<parallel>], iteration_bounds = array<i64: 1>, scalar_prefetch = 0 : i64, scratch_operands = 0 : i64, tpu.core_type = #tpu.core_type<tc>, window_params = [{transform_indices = @transform_0, window_bounds = array<i64: 8, 2>}, {pipeline_mode = #tpu.pipeline_mode<synchronous>, transform_indices = @transform_1, window_bounds = array<i64: 2, 128>}, {pipeline_mode = #tpu.pipeline_mode<synchronous>, transform_indices = @transform_2, window_bounds = array<i64: 128, 128>}, {pipeline_mode = #tpu.pipeline_mode<synchronous>, transform_indices = @transform_3, window_bounds = array<i64: 128, 2>}, {pipeline_mode = #tpu.pipeline_mode<synchronous>, transform_indices = @transform_4, window_bounds = array<i64: 8, 128>}, {transform_indices = @transform_5, window_bounds = array<i64: 8, 2>}]} {
    %c0 = arith.constant 0 : index
    %c0_0 = arith.constant 0 : index
    %0 = vector.load %arg1[%c0, %c0_0] : memref<8x2xf32, #tpu.memory_space<vmem>>, vector<8x2xf32>
    %c0_1 = arith.constant 0 : index
    %c0_2 = arith.constant 0 : index
    %1 = vector.load %arg2[%c0_1, %c0_2] : memref<2x128xf32, #tpu.memory_space<vmem>>, vector<2x128xf32>
    %cst = arith.constant dense<0.000000e+00> : vector<8x128xf32>
    %2 = tpu.matmul %0, %1, %cst {dimension_numbers = #tpu.dot_dimension_numbers<[1], [0], [0], [1], [0, 0, 1, 1], [], []>} : vector<8x2xf32>, vector<2x128xf32>, vector<8x128xf32> -> vector<8x128xf32>
    %c0_3 = arith.constant 0 : index
    %c0_4 = arith.constant 0 : index
    %3 = vector.load %arg5[%c0_3, %c0_4] : memref<8x128xf32, #tpu.memory_space<vmem>>, vector<1x128xf32>
    %4 = vector.broadcast %3 : vector<1x128xf32> to vector<8x128xf32>
    %5 = arith.addf %2, %4 : vector<8x128xf32>
    %cst_5 = arith.constant 0.000000e+00 : f32
    %6 = vector.broadcast %cst_5 : f32 to vector<8x128xf32>
    %7 = arith.maximumf %5, %6 : vector<8x128xf32>
    %c0_6 = arith.constant 0 : index
    %c0_7 = arith.constant 0 : index
    %8 = vector.load %arg3[%c0_6, %c0_7] : memref<128x128xf32, #tpu.memory_space<vmem>>, vector<128x128xf32>
    %cst_8 = arith.constant dense<0.000000e+00> : vector<8x128xf32>
    %9 = tpu.matmul %7, %8, %cst_8 {dimension_numbers = #tpu.dot_dimension_numbers<[1], [0], [0], [1], [0, 0, 1, 1], [], []>} : vector<8x128xf32>, vector<128x128xf32>, vector<8x128xf32> -> vector<8x128xf32>
    %c1 = arith.constant 1 : index
    %c0_9 = arith.constant 0 : index
    %10 = vector.load %arg5[%c1, %c0_9] : memref<8x128xf32, #tpu.memory_space<vmem>>, vector<1x128xf32>
    %11 = vector.broadcast %10 : vector<1x128xf32> to vector<8x128xf32>
    %12 = arith.addf %9, %11 : vector<8x128xf32>
    %cst_10 = arith.constant 0.000000e+00 : f32
    %13 = vector.broadcast %cst_10 : f32 to vector<8x128xf32>
    %14 = arith.maximumf %12, %13 : vector<8x128xf32>
    %c0_11 = arith.constant 0 : index
    %c0_12 = arith.constant 0 : index
    %15 = vector.load %arg4[%c0_11, %c0_12] : memref<128x2xf32, #tpu.memory_space<vmem>>, vector<128x2xf32>
    %cst_13 = arith.constant dense<0.000000e+00> : vector<8x2xf32>
    %16 = tpu.matmul %14, %15, %cst_13 {dimension_numbers = #tpu.dot_dimension_numbers<[1], [0], [0], [1], [0, 0, 1, 1], [], []>} : vector<8x128xf32>, vector<128x2xf32>, vector<8x2xf32> -> vector<8x2xf32>
    %c2 = arith.constant 2 : index
    %c0_14 = arith.constant 0 : index
    %17 = vector.load %arg5[%c2, %c0_14] : memref<8x128xf32, #tpu.memory_space<vmem>>, vector<1x2xf32>
    %18 = vector.broadcast %17 : vector<1x2xf32> to vector<8x2xf32>
    %19 = arith.addf %16, %18 : vector<8x2xf32>
    %c0_15 = arith.constant 0 : index
    %c0_16 = arith.constant 0 : index
    %20 = vector.load %arg6[%c0_15, %c0_16] : memref<8x2xf32, #tpu.memory_space<vmem>>, vector<8x2xf32>
    tpu.vector_store %arg6[%c0_15, %c0_16], %19 {strides = array<i32>} : memref<8x2xf32, #tpu.memory_space<vmem>>, vector<8x2xf32>,
    return
  }
  func.func @transform_0(%arg0: i32) -> (i32, i32) {
    %c0_i32 = arith.constant 0 : i32
    %c0_i32_0 = arith.constant 0 : i32
    return %arg0, %c0_i32 : i32, i32
  }
  func.func @transform_1(%arg0: i32) -> (i32, i32) {
    %c0_i32 = arith.constant 0 : i32
    %c0_i32_0 = arith.constant 0 : i32
    %c0_i32_1 = arith.constant 0 : i32
    return %c0_i32, %c0_i32_0 : i32, i32
  }
  func.func @transform_2(%arg0: i32) -> (i32, i32) {
    %c0_i32 = arith.constant 0 : i32
    %c0_i32_0 = arith.constant 0 : i32
    %c0_i32_1 = arith.constant 0 : i32
    return %c0_i32, %c0_i32_0 : i32, i32
  }
  func.func @transform_3(%arg0: i32) -> (i32, i32) {
    %c0_i32 = arith.constant 0 : i32
    %c0_i32_0 = arith.constant 0 : i32
    %c0_i32_1 = arith.constant 0 : i32
    return %c0_i32, %c0_i32_0 : i32, i32
  }
  func.func @transform_4(%arg0: i32) -> (i32, i32) {
    %c0_i32 = arith.constant 0 : i32
    %c0_i32_0 = arith.constant 0 : i32
    %c0_i32_1 = arith.constant 0 : i32
    return %c0_i32, %c0_i32_0 : i32, i32
  }
  func.func @transform_5(%arg0: i32) -> (i32, i32) {
    %c0_i32 = arith.constant 0 : i32
    %c0_i32_0 = arith.constant 0 : i32
    return %arg0, %c0_i32 : i32, i32
  }
}

</mosaic_0001>

<llo_original>
// kernel: mlp_forward.1
$region0: #{mlp_forward.1}
  #allocation0 [shape = 'u32[]', space=smem, size = 0x4, offset = 0x4, fixed_abs, tag = 'smem constant byte address 0x4 - core index']
  #allocation1 [shape = 'u32[144,128]{1,0:T(1,128)}', space=vmem, size = 0x12000, scoped, tag = 'internal scratch']
  %s0 = inlined_call_operand.vmem [shape: f32[8,2], index: 0, kind: input, shape index: {}]
  %s1 = inlined_call_operand.vmem [shape: f32[2,128], index: 1, kind: input, shape index: {}]
  %s2 = inlined_call_operand.vmem [shape: f32[128,128], index: 2, kind: input, shape index: {}]
  %s3 = inlined_call_operand.vmem [shape: f32[128,2], index: 3, kind: input, shape index: {}]
  %s4 = inlined_call_operand.vmem [shape: f32[8,128], index: 4, kind: input, shape index: {}]
  %s5 = inlined_call_operand.vmem [shape: f32[8,2], index: 5, kind: output, shape index: {}]
  %s6 = sld [smem:[#allocation0]]
  $region30: #{mlp_forward.1} parent=0
    _
  %s8 = ssub.s32 1, %s6
  %s9 = scalar_select 0, %s8, %s6
  // Predicated region
  $region2: #{mlp_forward.1} parent=0 // pred_check
    _
  $region3: #{mlp_forward.1} parent=0 // pred_check_branch
    %11 = sbr.rel (0) target = $region5
  $region4: #{mlp_forward.1} parent=0 // pred_region
    _
  $region5: #{mlp_forward.1} parent=0 // pred_fallthru
    _
  // Predicated region
  $region6: #{mlp_forward.1} parent=0 // pred_check
    _
  $region7: #{mlp_forward.1} parent=0 // pred_check_branch
    %13 = sbr.rel (0) target = $region9
  $region8: #{mlp_forward.1} parent=0 // pred_region
    _
  $region9: #{mlp_forward.1} parent=0 // pred_fallthru
    _
  // Predicated region
  $region10: #{mlp_forward.1} parent=0 // pred_check
    _
  $region11: #{mlp_forward.1} parent=0 // pred_check_branch
    %15 = sbr.rel (0) target = $region13
  $region12: #{mlp_forward.1} parent=0 // pred_region
    _
  $region13: #{mlp_forward.1} parent=0 // pred_fallthru
    _
  // Predicated region
  $region14: #{mlp_forward.1} parent=0 // pred_check
    _
  $region15: #{mlp_forward.1} parent=0 // pred_check_branch
    %17 = sbr.rel (0) target = $region17
  $region16: #{mlp_forward.1} parent=0 // pred_region
    _
  $region17: #{mlp_forward.1} parent=0 // pred_fallthru
    _
  // Predicated region
  $region18: #{mlp_forward.1} parent=0 // pred_check
    _
  $region19: #{mlp_forward.1} parent=0 // pred_check_branch
    %19 = sbr.rel (0) target = $region21
  $region20: #{mlp_forward.1} parent=0 // pred_region
    _
  $region21: #{mlp_forward.1} parent=0 // pred_fallthru
    _
  %v20 = vld [vmem:[%s0] sm:$0xff]
  %v21 = vld [vmem:[%s1] sm:$0x3]
  %v22 = vld [vmem:[%s4] sm:$0x1]
  %v23 = vlaneseq
  %v24 = vshrl.u32 %v23, 7
  %v25 = vsub.s32 0, %v24
  %v26 = vrot.slane %v22, %v25
  %vm27 = vcmask 15360
  %v29 = vsel %vm27, %v20, 0
  %vm31 = vcmask 1041408
  %v33 = vsel %vm31, %v21, 0
  %35 = vmatprep.subr.mxu0 0.0
  %36 = vmatpush1.msra.mxu0 0.0
  %37 = vmatprep.subr.mxu0 0.0
  %38 = vmatpush1.msra.mxu0 0.0
  %39 = vmatprep.subr.mxu0 0.0
  %40 = vmatpush1.msra.mxu0 0.0
  %41 = vmatprep.subr.mxu0 0.0
  %42 = vmatpush1.msra.mxu0 0.0
  %43 = vmatprep.subr.mxu0 0.0
  %44 = vmatpush1.msra.mxu0 0.0
  %45 = vmatprep.subr.mxu0 0.0
  %46 = vmatpush1.msra.mxu0 0.0
  %47 = vmatprep.subr.mxu0 0.0
  %48 = vmatpush1.msra.mxu0 0.0
  %49 = vmatprep.subr.mxu0 0.0
  %50 = vmatpush1.msra.mxu0 0.0
  %51 = vmatprep.subr.mxu0 0.0
  %52 = vmatpush1.msra.mxu0 0.0
  %53 = vmatprep.subr.mxu0 0.0
  %54 = vmatpush1.msra.mxu0 0.0
  %55 = vmatprep.subr.mxu0 0.0
  %56 = vmatpush1.msra.mxu0 0.0
  %57 = vmatprep.subr.mxu0 0.0
  %58 = vmatpush1.msra.mxu0 0.0
  %59 = vmatprep.subr.mxu0 0.0
  %60 = vmatpush1.msra.mxu0 0.0
  %61 = vmatprep.subr.mxu0 0.0
  %62 = vmatpush1.msra.mxu0 0.0
  %63 = vmatprep.subr.mxu0 0.0
  %64 = vmatpush1.msra.mxu0 0.0
  %65 = vmatprep.subr.mxu0 0.0
  %66 = vmatpush1.msra.mxu0 %v33
  %67 = vmatprep.subr.mxu0 0.0
  %68 = vmatpush2.msra.mxu0 0.0
  %69 = vmatprep.subr.mxu0 0.0
  %70 = vmatpush2.msra.mxu0 0.0
  %71 = vmatprep.subr.mxu0 0.0
  %72 = vmatpush2.msra.mxu0 0.0
  %73 = vmatprep.subr.mxu0 0.0
  %74 = vmatpush2.msra.mxu0 0.0
  %75 = vmatprep.subr.mxu0 0.0
  %76 = vmatpush2.msra.mxu0 0.0
  %77 = vmatprep.subr.mxu0 0.0
  %78 = vmatpush2.msra.mxu0 0.0
  %79 = vmatprep.subr.mxu0 0.0
  %80 = vmatpush2.msra.mxu0 0.0
  %81 = vmatprep.subr.mxu0 0.0
  %82 = vmatpush2.msra.mxu0 0.0
  %83 = vmatprep.subr.mxu0 0.0
  %84 = vmatpush2.msra.mxu0 0.0
  %85 = vmatprep.subr.mxu0 0.0
  %86 = vmatpush2.msra.mxu0 0.0
  %87 = vmatprep.subr.mxu0 0.0
  %88 = vmatpush2.msra.mxu0 0.0
  %89 = vmatprep.subr.mxu0 0.0
  %90 = vmatpush2.msra.mxu0 0.0
  %91 = vmatprep.subr.mxu0 0.0
  %92 = vmatpush2.msra.mxu0 0.0
  %93 = vmatprep.subr.mxu0 0.0
  %94 = vmatpush2.msra.mxu0 0.0
  %95 = vmatprep.subr.mxu0 0.0
  %96 = vmatpush2.msra.mxu0 0.0
  %97 = vmatprep.subr.mxu0 0.0
  %98 = vmatpush2.msra.mxu0 0.0
  %99 = vmatprep.mubr.f32.mxu0 0.0
  %100 = vmatmul.mubr.f32.gmra.mxu0 %v29
  %v101 = vpop.f32.mrf.mxu0
  %v102 = vadd.f32 %v26, %v101
  %v103 = vpop.f32.mrf.mxu0
  %104 = vdwg.mxu0
  %v105 = vmax.f32 %v102, 0.0
  %v106 = vld [vmem:[%s2] sm:$0xff]
  %v107 = vld [vmem:[%s2 + $0x8] sm:$0xff]
  %v108 = vld [vmem:[%s2 + $0x10] sm:$0xff]
  %v109 = vld [vmem:[%s2 + $0x18] sm:$0xff]
  %v110 = vld [vmem:[%s2 + $0x20] sm:$0xff]
  %v111 = vld [vmem:[%s2 + $0x28] sm:$0xff]
  %v112 = vld [vmem:[%s2 + $0x30] sm:$0xff]
  %v113 = vld [vmem:[%s2 + $0x38] sm:$0xff]
  %v114 = vld [vmem:[%s2 + $0x40] sm:$0xff]
  %v115 = vld [vmem:[%s2 + $0x48] sm:$0xff]
  %v116 = vld [vmem:[%s2 + $0x50] sm:$0xff]
  %v117 = vld [vmem:[%s2 + $0x58] sm:$0xff]
  %v118 = vld [vmem:[%s2 + $0x60] sm:$0xff]
  %v119 = vld [vmem:[%s2 + $0x68] sm:$0xff]
  %v120 = vld [vmem:[%s2 + $0x70] sm:$0xff]
  %v121 = vld [vmem:[%s2 + $0x78] sm:$0xff]
  %v122 = vld [vmem:[%s4 + $0x1] sm:$0x1]
  %v123 = vlaneseq
  %v124 = vshrl.u32 %v123, 7
  %v125 = vsub.s32 0, %v124
  %v126 = vrot.slane %v122, %v125
  %127 = vmatprep.subr.mxu0 0.0
  %128 = vmatpush1.msra.mxu0 %v121
  %129 = vmatprep.subr.mxu0 0.0
  %130 = vmatpush1.msra.mxu0 %v120
  %131 = vmatprep.subr.mxu0 0.0
  %132 = vmatpush1.msra.mxu0 %v119
  %133 = vmatprep.subr.mxu0 0.0
  %134 = vmatpush1.msra.mxu0 %v118
  %135 = vmatprep.subr.mxu0 0.0
  %136 = vmatpush1.msra.mxu0 %v117
  %137 = vmatprep.subr.mxu0 0.0
  %138 = vmatpush1.msra.mxu0 %v116
  %139 = vmatprep.subr.mxu0 0.0
  %140 = vmatpush1.msra.mxu0 %v115
  %141 = vmatprep.subr.mxu0 0.0
  %142 = vmatpush1.msra.mxu0 %v114
  %143 = vmatprep.subr.mxu0 0.0
  %144 = vmatpush1.msra.mxu0 %v113
  %145 = vmatprep.subr.mxu0 0.0
  %146 = vmatpush1.msra.mxu0 %v112
  %147 = vmatprep.subr.mxu0 0.0
  %148 = vmatpush1.msra.mxu0 %v111
  %149 = vmatprep.subr.mxu0 0.0
  %150 = vmatpush1.msra.mxu0 %v110
  %151 = vmatprep.subr.mxu0 0.0
  %152 = vmatpush1.msra.mxu0 %v109
  %153 = vmatprep.subr.mxu0 0.0
  %154 = vmatpush1.msra.mxu0 %v108
  %155 = vmatprep.subr.mxu0 0.0
  %156 = vmatpush1.msra.mxu0 %v107
  %157 = vmatprep.subr.mxu0 0.0
  %158 = vmatpush1.msra.mxu0 %v106
  %159 = vmatprep.subr.mxu0 0.0
  %160 = vmatpush2.msra.mxu0 0.0
  %161 = vmatprep.subr.mxu0 0.0
  %162 = vmatpush2.msra.mxu0 0.0
  %163 = vmatprep.subr.mxu0 0.0
  %164 = vmatpush2.msra.mxu0 0.0
  %165 = vmatprep.subr.mxu0 0.0
  %166 = vmatpush2.msra.mxu0 0.0
  %167 = vmatprep.subr.mxu0 0.0
  %168 = vmatpush2.msra.mxu0 0.0
  %169 = vmatprep.subr.mxu0 0.0
  %170 = vmatpush2.msra.mxu0 0.0
  %171 = vmatprep.subr.mxu0 0.0
  %172 = vmatpush2.msra.mxu0 0.0
  %173 = vmatprep.subr.mxu0 0.0
  %174 = vmatpush2.msra.mxu0 0.0
  %175 = vmatprep.subr.mxu0 0.0
  %176 = vmatpush2.msra.mxu0 0.0
  %177 = vmatprep.subr.mxu0 0.0
  %178 = vmatpush2.msra.mxu0 0.0
  %179 = vmatprep.subr.mxu0 0.0
  %180 = vmatpush2.msra.mxu0 0.0
  %181 = vmatprep.subr.mxu0 0.0
  %182 = vmatpush2.msra.mxu0 0.0
  %183 = vmatprep.subr.mxu0 0.0
  %184 = vmatpush2.msra.mxu0 0.0
  %185 = vmatprep.subr.mxu0 0.0
  %186 = vmatpush2.msra.mxu0 0.0
  %187 = vmatprep.subr.mxu0 0.0
  %188 = vmatpush2.msra.mxu0 0.0
  %189 = vmatprep.subr.mxu0 0.0
  %190 = vmatpush2.msra.mxu0 0.0
  %191 = vmatprep.mubr.f32.mxu0 0.0
  %192 = vmatmul.mubr.f32.gmra.mxu0 %v105
  %v193 = vpop.f32.mrf.mxu0
  %v194 = vadd.f32 %v126, %v193
  %v195 = vpop.f32.mrf.mxu0
  %196 = vdwg.mxu0
  %v197 = vmax.f32 %v194, 0.0
  %v198 = vld [vmem:[%s3] sm:$0xff]
  %v199 = vld [vmem:[%s3 + $0x8] sm:$0xff]
  %v200 = vld [vmem:[%s3 + $0x10] sm:$0xff]
  %v201 = vld [vmem:[%s3 + $0x18] sm:$0xff]
  %v202 = vld [vmem:[%s3 + $0x20] sm:$0xff]
  %v203 = vld [vmem:[%s3 + $0x28] sm:$0xff]
  %v204 = vld [vmem:[%s3 + $0x30] sm:$0xff]
  %v205 = vld [vmem:[%s3 + $0x38] sm:$0xff]
  %v206 = vld [vmem:[%s3 + $0x40] sm:$0xff]
  %v207 = vld [vmem:[%s3 + $0x48] sm:$0xff]
  %v208 = vld [vmem:[%s3 + $0x50] sm:$0xff]
  %v209 = vld [vmem:[%s3 + $0x58] sm:$0xff]
  %v210 = vld [vmem:[%s3 + $0x60] sm:$0xff]
  %v211 = vld [vmem:[%s3 + $0x68] sm:$0xff]
  %v212 = vld [vmem:[%s3 + $0x70] sm:$0xff]
  %v213 = vld [vmem:[%s3 + $0x78] sm:$0xff]
  %v214 = vld [vmem:[%s4 + $0x2] sm:$0x1]
  %v215 = vlaneseq
  %v216 = vshrl.u32 %v215, 7
  %v217 = vsub.s32 0, %v216
  %v218 = vrot.slane %v214, %v217
  %219 = vmatprep.subr.mxu0 0.0
  %220 = vmatpush1.msra.mxu0 %v213
  %221 = vmatprep.subr.mxu0 0.0
  %222 = vmatpush1.msra.mxu0 %v212
  %223 = vmatprep.subr.mxu0 0.0
  %224 = vmatpush1.msra.mxu0 %v211
  %225 = vmatprep.subr.mxu0 0.0
  %226 = vmatpush1.msra.mxu0 %v210
  %227 = vmatprep.subr.mxu0 0.0
  %228 = vmatpush1.msra.mxu0 %v209
  %229 = vmatprep.subr.mxu0 0.0
  %230 = vmatpush1.msra.mxu0 %v208
  %231 = vmatprep.subr.mxu0 0.0
  %232 = vmatpush1.msra.mxu0 %v207
  %233 = vmatprep.subr.mxu0 0.0
  %234 = vmatpush1.msra.mxu0 %v206
  %235 = vmatprep.subr.mxu0 0.0
  %236 = vmatpush1.msra.mxu0 %v205
  %237 = vmatprep.subr.mxu0 0.0
  %238 = vmatpush1.msra.mxu0 %v204
  %239 = vmatprep.subr.mxu0 0.0
  %240 = vmatpush1.msra.mxu0 %v203
  %241 = vmatprep.subr.mxu0 0.0
  %242 = vmatpush1.msra.mxu0 %v202
  %243 = vmatprep.subr.mxu0 0.0
  %244 = vmatpush1.msra.mxu0 %v201
  %245 = vmatprep.subr.mxu0 0.0
  %246 = vmatpush1.msra.mxu0 %v200
  %247 = vmatprep.subr.mxu0 0.0
  %248 = vmatpush1.msra.mxu0 %v199
  %249 = vmatprep.subr.mxu0 0.0
  %250 = vmatpush1.msra.mxu0 %v198
  %251 = vmatprep.subr.mxu0 0.0
  %252 = vmatpush2.msra.mxu0 0.0
  %253 = vmatprep.subr.mxu0 0.0
  %254 = vmatpush2.msra.mxu0 0.0
  %255 = vmatprep.subr.mxu0 0.0
  %256 = vmatpush2.msra.mxu0 0.0
  %257 = vmatprep.subr.mxu0 0.0
  %258 = vmatpush2.msra.mxu0 0.0
  %259 = vmatprep.subr.mxu0 0.0
  %260 = vmatpush2.msra.mxu0 0.0
  %261 = vmatprep.subr.mxu0 0.0
  %262 = vmatpush2.msra.mxu0 0.0
  %263 = vmatprep.subr.mxu0 0.0
  %264 = vmatpush2.msra.mxu0 0.0
  %265 = vmatprep.subr.mxu0 0.0
  %266 = vmatpush2.msra.mxu0 0.0
  %267 = vmatprep.subr.mxu0 0.0
  %268 = vmatpush2.msra.mxu0 0.0
  %269 = vmatprep.subr.mxu0 0.0
  %270 = vmatpush2.msra.mxu0 0.0
  %271 = vmatprep.subr.mxu0 0.0
  %272 = vmatpush2.msra.mxu0 0.0
  %273 = vmatprep.subr.mxu0 0.0
  %274 = vmatpush2.msra.mxu0 0.0
  %275 = vmatprep.subr.mxu0 0.0
  %276 = vmatpush2.msra.mxu0 0.0
  %277 = vmatprep.subr.mxu0 0.0
  %278 = vmatpush2.msra.mxu0 0.0
  %279 = vmatprep.subr.mxu0 0.0
  %280 = vmatpush2.msra.mxu0 0.0
  %281 = vmatprep.subr.mxu0 0.0
  %282 = vmatpush2.msra.mxu0 0.0
  %283 = vmatprep.mubr.f32.mxu0 0.0
  %284 = vmatmul.mubr.f32.gmra.mxu0 %v197
  %v285 = vpop.f32.mrf.mxu0
  %v286 = vadd.f32 %v218, %v285
  %v287 = vpop.f32.mrf.mxu0
  %288 = vdwg.mxu0
  %289 = vst.msk [vmem:[%s5] sm:$0xff] %vm27, %v286
  // Predicated region
  $region22: #{mlp_forward.1} parent=0 // pred_check
    _
  $region23: #{mlp_forward.1} parent=0 // pred_check_branch
    %291 = sbr.rel (0) target = $region25
  $region24: #{mlp_forward.1} parent=0 // pred_region
    _
  $region25: #{mlp_forward.1} parent=0 // pred_fallthru
    _
  // Predicated region
  $region26: #{mlp_forward.1} parent=0 // pred_check
    _
  $region27: #{mlp_forward.1} parent=0 // pred_check_branch
    %293 = sbr.rel (0) target = $region29
  $region28: #{mlp_forward.1} parent=0 // pred_region
    _
  $region29: #{mlp_forward.1} parent=0 // pred_fallthru
    _

</llo_original>
